<compile_context>
chip_gen: v6e
topology: v6e:2x2x1
jax: 0.10.0
libtpu: 0.0.40
codegen_flags: <defaults>
</compile_context>

<pallas_src>
import functools

import numpy as np
import jax
import jax.numpy as jnp
from jax import lax
from jax.experimental import pallas as pl
from jax.experimental.pallas import tpu as pltpu


# Matcher hyper-parameters of HungarianMatcher_Crowd (class / point cost weights).
_COST_CLASS_W = 1.0
_COST_POINT_W = 0.05


def _row_tile(h):
    """Largest row tile <= 256 that evenly divides H (multiple of 8 when tiled)."""
    if h <= 256:
        return h
    for t in (256, 128, 64, 32, 16, 8):
        if h % t == 0:
            return t
    return h


# ---------------------------------------------------------------------------
# Pallas kernels
# ---------------------------------------------------------------------------
def _make_cost_kernel(num_cls):
    """Matching cost  C[b, n, q] = -w_cls * p(label_n | q) + w_pt * ||x_q - y_n||_2.

    Inputs are lane-dense on Q: logits (C, B, Q), pred pts (2, B, Q), tgt pts (2, B, N),
    labels (B, N) int32.  Output (B, N, Q) keeps Q on the lane axis.
    """

    def kernel(logits_ref, pq_ref, pt_ref, labels_ref, out_ref):
        # softmax over the C planes with plain VPU ops (C is tiny; no cross-lane reduce).
        planes = [logits_ref[c].astype(jnp.float32) for c in range(num_cls)]   # (B, Q)
        m = planes[0]
        for c in range(1, num_cls):
            m = jnp.maximum(m, planes[c])
        exps = [jnp.exp(p - m) for p in planes]
        s = exps[0]
        for c in range(1, num_cls):
            s = s + exps[c]
        inv_s = 1.0 / s

        labels = labels_ref[...]                                               # (B, N)
        cc = jnp.zeros(out_ref.shape, jnp.float32)                             # (B, N, Q)
        for c in range(num_cls):
            sel = (labels == c).astype(jnp.float32)[:, :, None]                # (B, N, 1)
            prob_c = (exps[c] * inv_s)[:, None, :]                             # (B, 1, Q)
            cc = cc + sel * prob_c                                             # compare+select, no MXU

        px = pq_ref[0].astype(jnp.float32)
        py = pq_ref[1].astype(jnp.float32)
        tx = pt_ref[0].astype(jnp.float32)
        ty = pt_ref[1].astype(jnp.float32)
        dx = tx[:, :, None] - px[:, None, :]                                   # (B, N, Q)
        dy = ty[:, :, None] - py[:, None, :]
        dist = jnp.sqrt(dx * dx + dy * dy)

        out_ref[...] = (-_COST_CLASS_W) * cc + _COST_POINT_W * dist

    return kernel


def _make_cls_pts_kernel(num_cls, eos_coef, num_boxes):
    """Fused weighted cross-entropy + matched-point MSE.

    logits (C, B, Q), target_classes (B, Q) int32, pred/target point planes (2, B, Q),
    mask (B, Q).  Class 0 is the no-object class (empty_weight[0] = eos_coef).
    """

    def kernel(logits_ref, tcls_ref, pq_ref, tq_ref, mask_ref, ce_ref, pts_ref):
        # --- weighted CE == F.cross_entropy(logits.transpose(1,2), tcls, empty_weight) ---
        planes = [logits_ref[c].astype(jnp.float32) for c in range(num_cls)]   # (B, Q)
        m = planes[0]
        for c in range(1, num_cls):
            m = jnp.maximum(m, planes[c])
        s = jnp.exp(planes[0] - m)
        for c in range(1, num_cls):
            s = s + jnp.exp(planes[c] - m)
        lse = m + jnp.log(s)                                                   # (B, Q)

        tcls = tcls_ref[...]
        logit_t = jnp.zeros_like(m)
        for c in range(num_cls):
            logit_t = logit_t + jnp.where(tcls == c, planes[c], 0.0)
        nll = lse - logit_t                                                    # (B, Q)
        wt = jnp.where(tcls == 0, jnp.float32(eos_coef), jnp.float32(1.0))     # empty_weight[tcls]
        ce_ref[...] = jnp.sum(wt * nll, axis=(0, 1), keepdims=True) / \
            jnp.sum(wt, axis=(0, 1), keepdims=True)                            # (1, 1)

        # --- points: sum over matched queries of |pred - tgt|^2 / num_boxes ---
        dx = pq_ref[0].astype(jnp.float32) - tq_ref[0].astype(jnp.float32)
        dy = pq_ref[1].astype(jnp.float32) - tq_ref[1].astype(jnp.float32)
        msk = mask_ref[...]
        pts_ref[...] = jnp.sum(msk * (dx * dx + dy * dy),
                               axis=(0, 1), keepdims=True) / num_boxes         # (1, 1)

    return kernel


def _make_density_kernel(batch_size):
    """Fused density losses:  sum_b ||den_k[b] - tgt[b]||_F^2 / (2*B)  for k in {1, 2}.

    Grid = (B, row_tiles); the target density tile is read once per grid point and reused
    for both predictions.  Outputs are resident (1,1) accumulators (pl.when init/finalize).
    """
    inv = 1.0 / (2.0 * float(batch_size))

    def kernel(d1_ref, d2_ref, t_ref, o1_ref, o2_ref):
        b = pl.program_id(0)
        r = pl.program_id(1)
        is_first = jnp.logical_and(b == 0, r == 0)
        is_last = jnp.logical_and(b == pl.num_programs(0) - 1,
                                  r == pl.num_programs(1) - 1)

        @pl.when(is_first)
        def _():
            o1_ref[...] = jnp.zeros_like(o1_ref)
            o2_ref[...] = jnp.zeros_like(o2_ref)

        t = t_ref[0].astype(jnp.float32)                                       # (TH, W)
        e1 = d1_ref[0].astype(jnp.float32) - t
        e2 = d2_ref[0].astype(jnp.float32) - t
        o1_ref[...] += jnp.reshape(jnp.sum(e1 * e1), (1, 1))
        o2_ref[...] += jnp.reshape(jnp.sum(e2 * e2), (1, 1))

        @pl.when(is_last)
        def _():
            o1_ref[...] = o1_ref[...] * inv
            o2_ref[...] = o2_ref[...] * inv

    return kernel


# ---------------------------------------------------------------------------
# pallas_call wrappers
# ---------------------------------------------------------------------------
def matching_cost(logits_t, pq, pt, labels):
    c, b, q = logits_t.shape
    n = labels.shape[1]
    # Gridless call: default full-array VMEM blocks for all operands / the output.
    return pl.pallas_call(
        _make_cost_kernel(c),
        out_shape=jax.ShapeDtypeStruct((b, n, q), jnp.float32),
    )(logits_t, pq, pt, labels)


def cls_pts_losses(logits_t, target_classes, pq, matched, mask, *, eos_coef, num_boxes):
    c, b, q = logits_t.shape
    ce, pts = pl.pallas_call(
        _make_cls_pts_kernel(c, eos_coef, num_boxes),
        out_shape=(jax.ShapeDtypeStruct((1, 1), jnp.float32),
                   jax.ShapeDtypeStruct((1, 1), jnp.float32)),
    )(logits_t, target_classes, pq, matched, mask)
    return ce[0, 0], pts[0, 0]


def density_losses(den1, den2, tgt_den):
    b, h, w = tgt_den.shape
    th = _row_tile(h)
    grid = (b, max(h // th, 1))
    den_spec = pl.BlockSpec((1, th, w), lambda bi, ri: (bi, ri, 0))
    out_spec = pl.BlockSpec((1, 1), lambda bi, ri: (0, 0))
    o1, o2 = pl.pallas_call(
        _make_density_kernel(b),
        grid_spec=pltpu.PrefetchScalarGridSpec(
            num_scalar_prefetch=0,
            grid=grid,
            in_specs=(den_spec, den_spec, den_spec),
            out_specs=(out_spec, out_spec)),
        out_shape=(jax.ShapeDtypeStruct((1, 1), jnp.float32),
                   jax.ShapeDtypeStruct((1, 1), jnp.float32)),
        compiler_params=pltpu.CompilerParams(
            dimension_semantics=("arbitrary", "arbitrary")),
    )(den1, den2, tgt_den)
    return o1[0, 0], o2[0, 0]


# ---------------------------------------------------------------------------
# On-device greedy matcher (approximation of Hungarian matching)
# ---------------------------------------------------------------------------
def _greedy_assign(cost):
    """cost: (B, N, Q) -> src: (B, N) query index matched to target n (targets in order)."""
    b, n, q = cost.shape

    def step(used, cost_n):                       # used (B, Q) bool, cost_n (B, Q)
        masked = jnp.where(used, jnp.inf, cost_n)
        qi = jnp.argmin(masked, axis=-1)          # (B,)
        used = used.at[jnp.arange(b), qi].set(True)
        return used, qi

    used0 = jnp.zeros((b, q), dtype=bool)
    _, src = lax.scan(step, used0, jnp.swapaxes(cost, 0, 1))   # (N, B)
    return jnp.swapaxes(src, 0, 1).astype(jnp.int32)           # (B, N)


# ---------------------------------------------------------------------------
# Jitted device-side forward (single device: world_size == 1, no all_reduce)
# ---------------------------------------------------------------------------
def _criterion_forward(pred_logits, pred_points, den1, den2,
                       tgt_points, tgt_labels, tgt_den,
                       *, num_classes, eos_coef, losses):
    b, q, _ = pred_logits.shape
    n = tgt_labels.shape[1]

    # Lane-dense layouts: Q on the lane axis.
    logits_t = jnp.transpose(pred_logits, (2, 0, 1))               # (C, B, Q)
    pq = jnp.transpose(pred_points, (2, 0, 1))                     # (2, B, Q)
    pt = jnp.transpose(tgt_points.astype(jnp.float32), (2, 0, 1))  # (2, B, N)
    labels = tgt_labels.astype(jnp.int32)                          # (B, N)

    # ---- matcher: Pallas cost matrix + on-device greedy assignment (no host sync) ----
    cost = matching_cost(logits_t, pq, pt, labels)                 # (B, N, Q)
    src = _greedy_assign(cost)                                     # (B, N)

    bidx = jnp.arange(b)[:, None]
    target_classes = jnp.zeros((b, q), jnp.int32).at[bidx, src].set(labels)
    mask = jnp.zeros((b, q), jnp.float32).at[bidx, src].set(1.0)
    matched_x = jnp.zeros((b, q), jnp.float32).at[bidx, src].set(pt[0])
    matched_y = jnp.zeros((b, q), jnp.float32).at[bidx, src].set(pt[1])
    matched = jnp.stack([matched_x, matched_y])                    # (2, B, Q)

    num_boxes = float(max(b * n, 1))                               # world_size == 1

    out = {}
    if ('labels' in losses) or ('points' in losses):
        loss_ce, loss_pts = cls_pts_losses(
            logits_t, target_classes, pq, matched, mask,
            eos_coef=eos_coef, num_boxes=num_boxes)
        if 'labels' in losses:
            out['loss_ce'] = loss_ce
        if 'points' in losses:
            out['loss_points'] = loss_pts

    if ('count' in losses) or ('count2' in losses):
        d1 = den1[:, 0] if den1.ndim == 4 else den1                # NCHW -> (B, H, W)
        d2 = den2[:, 0] if den2.ndim == 4 else den2
        loss_den, loss_den2 = density_losses(d1, d2, tgt_den)
        if 'count' in losses:
            out['loss_den'] = loss_den
        if 'count2' in losses:
            out['loss_den2'] = loss_den2
    return out


# ---------------------------------------------------------------------------
# Criterion
# ---------------------------------------------------------------------------
class SetCriterionCrowdPallas:
    def __init__(self, num_classes, eos_coef, losses, matcher=None, weight_dict=None):
        self.num_classes = num_classes
        self.eos_coef = float(eos_coef)
        self.losses = tuple(losses)
        self.weight_dict = weight_dict
        # empty_weight buffer parity: ones(num_classes + 1), [0] = eos_coef (baked in kernel).
        self.empty_weight = jnp.ones((num_classes + 1,), jnp.float32).at[0].set(eos_coef)
        self._fwd = jax.jit(functools.partial(
            _criterion_forward,
            num_classes=num_classes,
            eos_coef=self.eos_coef,
            losses=self.losses))

    def forward(self, outputs, targets):
        for l in self.losses:
            if l not in ('labels', 'points', 'count', 'count2'):
                raise ValueError(f'do you really want to compute {l} loss?')

        out_dict = outputs[0]
        pred_logits = jnp.asarray(out_dict['pred_logits'])
        pred_points = jnp.asarray(out_dict['pred_points'])
        bsz = pred_logits.shape[0]

        tgt_points = jnp.stack([jnp.asarray(t['point'], jnp.float32) for t in targets])
        tgt_labels = jnp.stack([jnp.asarray(t['labels'], jnp.int32) for t in targets])

        need_den = ('count' in self.losses) or ('count2' in self.losses)
        if need_den:
            den1 = jnp.asarray(outputs[1])
            den2 = jnp.asarray(outputs[2]) if len(outputs) > 2 else jnp.asarray(outputs[1])
            tgt_den = jnp.stack([jnp.asarray(t['den_map'], jnp.float32) for t in targets])
        else:
            den1 = jnp.zeros((bsz, 1, 8, 128), jnp.float32)
            den2 = den1
            tgt_den = jnp.zeros((bsz, 8, 128), jnp.float32)

        return self._fwd(pred_logits, pred_points, den1, den2,
                         tgt_points, tgt_labels, tgt_den)


# ---------------------------------------------------------------------------
if __name__ == "__main__":
    key = jax.random.PRNGKey(0)
    B, Q, H, W = 2, 8, 16, 16
    num_classes = 1          # "person" class; logits have num_classes + 1 = 2 channels
    N = 4                    # ground-truth points per image

    k1, k2, k3, k4, k5, k6 = jax.random.split(key, 6)
    pred_logits = jax.random.normal(k1, (B, Q, num_classes + 1), jnp.float32)
    pred_points = jax.random.uniform(k2, (B, Q, 2), jnp.float32) * jnp.asarray([H, W], jnp.float32)
    den1 = jax.random.uniform(k3, (B, 1, H, W), jnp.float32)     # outputs[1], NCHW
    den2 = jax.random.uniform(k4, (B, 1, H, W), jnp.float32)     # outputs[2], NCHW
    tgt_points = jax.random.uniform(k5, (B, N, 2), jnp.float32) * jnp.asarray([H, W], jnp.float32)
    den_maps = jax.random.uniform(k6, (B, H, W), jnp.float32)

    targets = [
        dict(labels=np.ones((N,), np.int32),
             point=np.asarray(tgt_points[b_]),
             den_map=np.asarray(den_maps[b_]))
        for b_ in range(B)
    ]
    outputs = ({'pred_logits': pred_logits, 'pred_points': pred_points}, den1, den2)

    criterion = SetCriterionCrowdPallas(
        num_classes=num_classes, eos_coef=0.5,
        losses=['labels', 'points', 'count', 'count2'])

    losses = criterion.forward(outputs, targets)
    jax.block_until_ready(losses)
    print("KERNEL_OK")
</pallas_src>

<mosaic_0001>
module attributes {stable_mosaic.version = 11 : i64} {
  func.func @kernel(%arg0: memref<2x2x8xf32, #tpu.memory_space<vmem>>, %arg1: memref<2x2x8xf32, #tpu.memory_space<vmem>>, %arg2: memref<2x2x4xf32, #tpu.memory_space<vmem>>, %arg3: memref<2x4xi32, #tpu.memory_space<vmem>>, %arg4: memref<2x4x8xf32, #tpu.memory_space<vmem>>) attributes {dimension_semantics = [], scalar_prefetch = 0 : i64, scratch_operands = 0 : i64, tpu.core_type = #tpu.core_type<tc>} {
    %c0 = arith.constant 0 : index
    %c0_0 = arith.constant 0 : index
    %c0_1 = arith.constant 0 : index
    %0 = vector.load %arg0[%c0, %c0_0, %c0_1] : memref<2x2x8xf32, #tpu.memory_space<vmem>>, vector<1x2x8xf32>
    %1 = vector.shape_cast %0 : vector<1x2x8xf32> to vector<2x8xf32>
    %c1 = arith.constant 1 : index
    %c0_2 = arith.constant 0 : index
    %c0_3 = arith.constant 0 : index
    %2 = vector.load %arg0[%c1, %c0_2, %c0_3] : memref<2x2x8xf32, #tpu.memory_space<vmem>>, vector<1x2x8xf32>
    %3 = vector.shape_cast %2 : vector<1x2x8xf32> to vector<2x8xf32>
    %4 = arith.maximumf %1, %3 : vector<2x8xf32>
    %5 = arith.subf %1, %4 : vector<2x8xf32>
    %6 = math.exp %5 : vector<2x8xf32>
    %7 = arith.subf %3, %4 : vector<2x8xf32>
    %8 = math.exp %7 : vector<2x8xf32>
    %9 = arith.addf %6, %8 : vector<2x8xf32>
    %cst = arith.constant 1.000000e+00 : f32
    %10 = vector.broadcast %cst : f32 to vector<2x8xf32>
    %11 = arith.divf %10, %9 : vector<2x8xf32>
    %c0_4 = arith.constant 0 : index
    %c0_5 = arith.constant 0 : index
    %12 = vector.load %arg3[%c0_4, %c0_5] : memref<2x4xi32, #tpu.memory_space<vmem>>, vector<2x4xi32>
    %cst_6 = arith.constant 0.000000e+00 : f32
    %13 = vector.broadcast %cst_6 : f32 to vector<2x4x8xf32>
    %c0_i32 = arith.constant 0 : i32
    %14 = vector.broadcast %c0_i32 : i32 to vector<2x4xi32>
    %15 = arith.cmpi eq, %12, %14 : vector<2x4xi32>
    %16 = arith.extui %15 : vector<2x4xi1> to vector<2x4xi32>
    %17 = arith.sitofp %16 : vector<2x4xi32> to vector<2x4xf32>
    %18 = vector.shape_cast %17 : vector<2x4xf32> to vector<2x4x1xf32>
    %19 = arith.mulf %6, %11 : vector<2x8xf32>
    %20 = vector.shape_cast %19 : vector<2x8xf32> to vector<2x1x8xf32>
    %21 = vector.broadcast %18 : vector<2x4x1xf32> to vector<2x4x8xf32>
    %22 = vector.broadcast %20 : vector<2x1x8xf32> to vector<2x4x8xf32>
    %23 = arith.mulf %21, %22 : vector<2x4x8xf32>
    %24 = arith.addf %13, %23 : vector<2x4x8xf32>
    %c1_i32 = arith.constant 1 : i32
    %25 = vector.broadcast %c1_i32 : i32 to vector<2x4xi32>
    %26 = arith.cmpi eq, %12, %25 : vector<2x4xi32>
    %27 = arith.extui %26 : vector<2x4xi1> to vector<2x4xi32>
    %28 = arith.sitofp %27 : vector<2x4xi32> to vector<2x4xf32>
    %29 = vector.shape_cast %28 : vector<2x4xf32> to vector<2x4x1xf32>
    %30 = arith.mulf %8, %11 : vector<2x8xf32>
    %31 = vector.shape_cast %30 : vector<2x8xf32> to vector<2x1x8xf32>
    %32 = vector.broadcast %29 : vector<2x4x1xf32> to vector<2x4x8xf32>
    %33 = vector.broadcast %31 : vector<2x1x8xf32> to vector<2x4x8xf32>
    %34 = arith.mulf %32, %33 : vector<2x4x8xf32>
    %35 = arith.addf %24, %34 : vector<2x4x8xf32>
    %c0_7 = arith.constant 0 : index
    %c0_8 = arith.constant 0 : index
    %c0_9 = arith.constant 0 : index
    %36 = vector.load %arg1[%c0_7, %c0_8, %c0_9] : memref<2x2x8xf32, #tpu.memory_space<vmem>>, vector<1x2x8xf32>
    %37 = vector.shape_cast %36 : vector<1x2x8xf32> to vector<2x8xf32>
    %c1_10 = arith.constant 1 : index
    %c0_11 = arith.constant 0 : index
    %c0_12 = arith.constant 0 : index
    %38 = vector.load %arg1[%c1_10, %c0_11, %c0_12] : memref<2x2x8xf32, #tpu.memory_space<vmem>>, vector<1x2x8xf32>
    %39 = vector.shape_cast %38 : vector<1x2x8xf32> to vector<2x8xf32>
    %c0_13 = arith.constant 0 : index
    %c0_14 = arith.constant 0 : index
    %c0_15 = arith.constant 0 : index
    %40 = vector.load %arg2[%c0_13, %c0_14, %c0_15] : memref<2x2x4xf32, #tpu.memory_space<vmem>>, vector<1x2x4xf32>
    %41 = vector.shape_cast %40 : vector<1x2x4xf32> to vector<2x4xf32>
    %c1_16 = arith.constant 1 : index
    %c0_17 = arith.constant 0 : index
    %c0_18 = arith.constant 0 : index
    %42 = vector.load %arg2[%c1_16, %c0_17, %c0_18] : memref<2x2x4xf32, #tpu.memory_space<vmem>>, vector<1x2x4xf32>
    %43 = vector.shape_cast %42 : vector<1x2x4xf32> to vector<2x4xf32>
    %44 = vector.shape_cast %41 : vector<2x4xf32> to vector<2x4x1xf32>
    %45 = vector.shape_cast %37 : vector<2x8xf32> to vector<2x1x8xf32>
    %46 = vector.broadcast %44 : vector<2x4x1xf32> to vector<2x4x8xf32>
    %47 = vector.broadcast %45 : vector<2x1x8xf32> to vector<2x4x8xf32>
    %48 = arith.subf %46, %47 : vector<2x4x8xf32>
    %49 = vector.shape_cast %43 : vector<2x4xf32> to vector<2x4x1xf32>
    %50 = vector.shape_cast %39 : vector<2x8xf32> to vector<2x1x8xf32>
    %51 = vector.broadcast %49 : vector<2x4x1xf32> to vector<2x4x8xf32>
    %52 = vector.broadcast %50 : vector<2x1x8xf32> to vector<2x4x8xf32>
    %53 = arith.subf %51, %52 : vector<2x4x8xf32>
    %54 = arith.mulf %48, %48 : vector<2x4x8xf32>
    %55 = arith.mulf %53, %53 : vector<2x4x8xf32>
    %56 = arith.addf %54, %55 : vector<2x4x8xf32>
    %57 = math.sqrt %56 : vector<2x4x8xf32>
    %cst_19 = arith.constant -1.000000e+00 : f32
    %58 = vector.broadcast %cst_19 : f32 to vector<2x4x8xf32>
    %59 = arith.mulf %58, %35 : vector<2x4x8xf32>
    %cst_20 = arith.constant 5.000000e-02 : f32
    %60 = vector.broadcast %cst_20 : f32 to vector<2x4x8xf32>
    %61 = arith.mulf %60, %57 : vector<2x4x8xf32>
    %62 = arith.addf %59, %61 : vector<2x4x8xf32>
    %c0_21 = arith.constant 0 : index
    %c0_22 = arith.constant 0 : index
    %c0_23 = arith.constant 0 : index
    %63 = vector.load %arg4[%c0_21, %c0_22, %c0_23] : memref<2x4x8xf32, #tpu.memory_space<vmem>>, vector<2x4x8xf32>
    tpu.vector_store %arg4[%c0_21, %c0_22, %c0_23], %62 {strides = array<i32>} : memref<2x4x8xf32, #tpu.memory_space<vmem>>, vector<2x4x8xf32>,
    return
  }
}

module attributes {stable_mosaic.version = 11 : i64} {
  func.func @kernel(%arg0: memref<2x2x8xf32, #tpu.memory_space<vmem>>, %arg1: memref<2x8xi32, #tpu.memory_space<vmem>>, %arg2: memref<2x2x8xf32, #tpu.memory_space<vmem>>, %arg3: memref<2x2x8xf32, #tpu.memory_space<vmem>>, %arg4: memref<2x8xf32, #tpu.memory_space<vmem>>, %arg5: memref<1x1xf32, #tpu.memory_space<vmem>>, %arg6: memref<1x1xf32, #tpu.memory_space<vmem>>) attributes {dimension_semantics = [], scalar_prefetch = 0 : i64, scratch_operands = 0 : i64, tpu.core_type = #tpu.core_type<tc>} {
    %c0 = arith.constant 0 : index
    %c0_0 = arith.constant 0 : index
    %c0_1 = arith.constant 0 : index
    %0 = vector.load %arg0[%c0, %c0_0, %c0_1] : memref<2x2x8xf32, #tpu.memory_space<vmem>>, vector<1x2x8xf32>
    %1 = vector.shape_cast %0 : vector<1x2x8xf32> to vector<2x8xf32>
    %c1 = arith.constant 1 : index
    %c0_2 = arith.constant 0 : index
    %c0_3 = arith.constant 0 : index
    %2 = vector.load %arg0[%c1, %c0_2, %c0_3] : memref<2x2x8xf32, #tpu.memory_space<vmem>>, vector<1x2x8xf32>
    %3 = vector.shape_cast %2 : vector<1x2x8xf32> to vector<2x8xf32>
    %4 = arith.maximumf %1, %3 : vector<2x8xf32>
    %5 = arith.subf %1, %4 : vector<2x8xf32>
    %6 = math.exp %5 : vector<2x8xf32>
    %7 = arith.subf %3, %4 : vector<2x8xf32>
    %8 = math.exp %7 : vector<2x8xf32>
    %9 = arith.addf %6, %8 : vector<2x8xf32>
    %10 = math.log %9 : vector<2x8xf32>
    %11 = arith.addf %4, %10 : vector<2x8xf32>
    %c0_4 = arith.constant 0 : index
    %c0_5 = arith.constant 0 : index
    %12 = vector.load %arg1[%c0_4, %c0_5] : memref<2x8xi32, #tpu.memory_space<vmem>>, vector<2x8xi32>
    %cst = arith.constant 0.000000e+00 : f32
    %13 = vector.broadcast %cst : f32 to vector<2x8xf32>
    %c0_i32 = arith.constant 0 : i32
    %14 = vector.broadcast %c0_i32 : i32 to vector<2x8xi32>
    %15 = arith.cmpi eq, %12, %14 : vector<2x8xi32>
    %cst_6 = arith.constant 0.000000e+00 : f32
    %16 = vector.broadcast %cst_6 : f32 to vector<2x8xf32>
    %17 = arith.select %15, %1, %16 : vector<2x8xi1>, vector<2x8xf32>
    %18 = arith.addf %13, %17 : vector<2x8xf32>
    %c1_i32 = arith.constant 1 : i32
    %19 = vector.broadcast %c1_i32 : i32 to vector<2x8xi32>
    %20 = arith.cmpi eq, %12, %19 : vector<2x8xi32>
    %cst_7 = arith.constant 0.000000e+00 : f32
    %21 = vector.broadcast %cst_7 : f32 to vector<2x8xf32>
    %22 = arith.select %20, %3, %21 : vector<2x8xi1>, vector<2x8xf32>
    %23 = arith.addf %18, %22 : vector<2x8xf32>
    %24 = arith.subf %11, %23 : vector<2x8xf32>
    %c0_i32_8 = arith.constant 0 : i32
    %25 = vector.broadcast %c0_i32_8 : i32 to vector<2x8xi32>
    %26 = arith.cmpi eq, %12, %25 : vector<2x8xi32>
    %cst_9 = arith.constant 5.000000e-01 : f32
    %cst_10 = arith.constant 1.000000e+00 : f32
    %27 = vector.broadcast %cst_9 : f32 to vector<2x8xf32>
    %28 = vector.broadcast %cst_10 : f32 to vector<2x8xf32>
    %29 = arith.select %26, %27, %28 : vector<2x8xi1>, vector<2x8xf32>
    %30 = arith.mulf %29, %24 : vector<2x8xf32>
    %31 = vector.shape_cast %30 : vector<2x8xf32> to vector<1x2x8xf32>
    %cst_11 = arith.constant dense<0.000000e+00> : vector<1xf32>
    %32 = vector.multi_reduction <add>, %31, %cst_11 [1, 2] : vector<1x2x8xf32> to vector<1xf32>
    %33 = vector.shape_cast %32 : vector<1xf32> to vector<1x1x1xf32>
    %34 = vector.extract %33[0, 0, 0] : f32 from vector<1x1x1xf32>
    %35 = vector.broadcast %34 : f32 to vector<1x1xf32>
    %36 = vector.shape_cast %29 : vector<2x8xf32> to vector<1x2x8xf32>
    %cst_12 = arith.constant dense<0.000000e+00> : vector<1xf32>
    %37 = vector.multi_reduction <add>, %36, %cst_12 [1, 2] : vector<1x2x8xf32> to vector<1xf32>
    %38 = vector.shape_cast %37 : vector<1xf32> to vector<1x1x1xf32>
    %39 = vector.extract %38[0, 0, 0] : f32 from vector<1x1x1xf32>
    %40 = vector.broadcast %39 : f32 to vector<1x1xf32>
    %41 = arith.divf %35, %40 : vector<1x1xf32>
    %c0_13 = arith.constant 0 : index
    %c0_14 = arith.constant 0 : index
    %42 = vector.load %arg5[%c0_13, %c0_14] : memref<1x1xf32, #tpu.memory_space<vmem>>, vector<1x1xf32>
    tpu.vector_store %arg5[%c0_13, %c0_14], %41 {strides = array<i32>} : memref<1x1xf32, #tpu.memory_space<vmem>>, vector<1x1xf32>,
    %c0_15 = arith.constant 0 : index
    %c0_16 = arith.constant 0 : index
    %c0_17 = arith.constant 0 : index
    %43 = vector.load %arg2[%c0_15, %c0_16, %c0_17] : memref<2x2x8xf32, #tpu.memory_space<vmem>>, vector<1x2x8xf32>
    %44 = vector.shape_cast %43 : vector<1x2x8xf32> to vector<2x8xf32>
    %c0_18 = arith.constant 0 : index
    %c0_19 = arith.constant 0 : index
    %c0_20 = arith.constant 0 : index
    %45 = vector.load %arg3[%c0_18, %c0_19, %c0_20] : memref<2x2x8xf32, #tpu.memory_space<vmem>>, vector<1x2x8xf32>
    %46 = vector.shape_cast %45 : vector<1x2x8xf32> to vector<2x8xf32>
    %47 = arith.subf %44, %46 : vector<2x8xf32>
    %c1_21 = arith.constant 1 : index
    %c0_22 = arith.constant 0 : index
    %c0_23 = arith.constant 0 : index
    %48 = vector.load %arg2[%c1_21, %c0_22, %c0_23] : memref<2x2x8xf32, #tpu.memory_space<vmem>>, vector<1x2x8xf32>
    %49 = vector.shape_cast %48 : vector<1x2x8xf32> to vector<2x8xf32>
    %c1_24 = arith.constant 1 : index
    %c0_25 = arith.constant 0 : index
    %c0_26 = arith.constant 0 : index
    %50 = vector.load %arg3[%c1_24, %c0_25, %c0_26] : memref<2x2x8xf32, #tpu.memory_space<vmem>>, vector<1x2x8xf32>
    %51 = vector.shape_cast %50 : vector<1x2x8xf32> to vector<2x8xf32>
    %52 = arith.subf %49, %51 : vector<2x8xf32>
    %c0_27 = arith.constant 0 : index
    %c0_28 = arith.constant 0 : index
    %53 = vector.load %arg4[%c0_27, %c0_28] : memref<2x8xf32, #tpu.memory_space<vmem>>, vector<2x8xf32>
    %54 = arith.mulf %47, %47 : vector<2x8xf32>
    %55 = arith.mulf %52, %52 : vector<2x8xf32>
    %56 = arith.addf %54, %55 : vector<2x8xf32>
    %57 = arith.mulf %53, %56 : vector<2x8xf32>
    %58 = vector.shape_cast %57 : vector<2x8xf32> to vector<1x2x8xf32>
    %cst_29 = arith.constant dense<0.000000e+00> : vector<1xf32>
    %59 = vector.multi_reduction <add>, %58, %cst_29 [1, 2] : vector<1x2x8xf32> to vector<1xf32>
    %60 = vector.shape_cast %59 : vector<1xf32> to vector<1x1x1xf32>
    %61 = vector.extract %60[0, 0, 0] : f32 from vector<1x1x1xf32>
    %62 = vector.broadcast %61 : f32 to vector<1x1xf32>
    %cst_30 = arith.constant 8.000000e+00 : f32
    %63 = vector.broadcast %cst_30 : f32 to vector<1x1xf32>
    %64 = arith.divf %62, %63 : vector<1x1xf32>
    %c0_31 = arith.constant 0 : index
    %c0_32 = arith.constant 0 : index
    %65 = vector.load %arg6[%c0_31, %c0_32] : memref<1x1xf32, #tpu.memory_space<vmem>>, vector<1x1xf32>
    tpu.vector_store %arg6[%c0_31, %c0_32], %64 {strides = array<i32>} : memref<1x1xf32, #tpu.memory_space<vmem>>, vector<1x1xf32>,
    return
  }
}

module attributes {stable_mosaic.version = 11 : i64} {
  func.func @kernel(%arg0: i32, %arg1: i32, %arg2: memref<1x16x16xf32, #tpu.memory_space<vmem>>, %arg3: memref<1x16x16xf32, #tpu.memory_space<vmem>>, %arg4: memref<1x16x16xf32, #tpu.memory_space<vmem>>, %arg5: memref<1x1xf32, #tpu.memory_space<vmem>>, %arg6: memref<1x1xf32, #tpu.memory_space<vmem>>) attributes {dimension_semantics = [#tpu.dimension_semantics<arbitrary>, #tpu.dimension_semantics<arbitrary>], iteration_bounds = array<i64: 2, 1>, scalar_prefetch = 0 : i64, scratch_operands = 0 : i64, tpu.core_type = #tpu.core_type<tc>, window_params = [{transform_indices = @transform_0, window_bounds = array<i64: 1, 16, 16>}, {transform_indices = @transform_1, window_bounds = array<i64: 1, 16, 16>}, {transform_indices = @transform_2, window_bounds = array<i64: 1, 16, 16>}, {pipeline_mode = #tpu.pipeline_mode<synchronous>, transform_indices = @transform_3, window_bounds = array<i64: 1, 1>}, {pipeline_mode = #tpu.pipeline_mode<synchronous>, transform_indices = @transform_4, window_bounds = array<i64: 1, 1>}]} {
    %c0_i32 = arith.constant 0 : i32
    %0 = arith.cmpi eq, %arg0, %c0_i32 : i32
    %c0_i32_0 = arith.constant 0 : i32
    %1 = arith.cmpi eq, %arg1, %c0_i32_0 : i32
    %2 = arith.andi %0, %1 : i1
    %c1_i32 = arith.constant 1 : i32
    %3 = arith.cmpi eq, %arg0, %c1_i32 : i32
    %c0_i32_1 = arith.constant 0 : i32
    %4 = arith.cmpi eq, %arg1, %c0_i32_1 : i32
    %5 = arith.andi %3, %4 : i1
    %6 = arith.extui %2 : i1 to i32
    %c0_i32_2 = arith.constant 0 : i32
    %7 = arith.cmpi ne, %6, %c0_i32_2 : i32
    scf.if %7 {
      %cst_21 = arith.constant 0.000000e+00 : f32
      %36 = vector.broadcast %cst_21 : f32 to vector<1x1xf32>
      %c0_22 = arith.constant 0 : index
      %c0_23 = arith.constant 0 : index
      %37 = vector.load %arg5[%c0_22, %c0_23] : memref<1x1xf32, #tpu.memory_space<vmem>>, vector<1x1xf32>
      tpu.vector_store %arg5[%c0_22, %c0_23], %36 {strides = array<i32>} : memref<1x1xf32, #tpu.memory_space<vmem>>, vector<1x1xf32>,
      %cst_24 = arith.constant 0.000000e+00 : f32
      %38 = vector.broadcast %cst_24 : f32 to vector<1x1xf32>
      %c0_25 = arith.constant 0 : index
      %c0_26 = arith.constant 0 : index
      %39 = vector.load %arg6[%c0_25, %c0_26] : memref<1x1xf32, #tpu.memory_space<vmem>>, vector<1x1xf32>
      tpu.vector_store %arg6[%c0_25, %c0_26], %38 {strides = array<i32>} : memref<1x1xf32, #tpu.memory_space<vmem>>, vector<1x1xf32>,
    } else {
    }
    %c0 = arith.constant 0 : index
    %c0_3 = arith.constant 0 : index
    %c0_4 = arith.constant 0 : index
    %8 = vector.load %arg4[%c0, %c0_3, %c0_4] : memref<1x16x16xf32, #tpu.memory_space<vmem>>, vector<1x16x16xf32>
    %9 = vector.shape_cast %8 : vector<1x16x16xf32> to vector<16x16xf32>
    %c0_5 = arith.constant 0 : index
    %c0_6 = arith.constant 0 : index
    %c0_7 = arith.constant 0 : index
    %10 = vector.load %arg2[%c0_5, %c0_6, %c0_7] : memref<1x16x16xf32, #tpu.memory_space<vmem>>, vector<1x16x16xf32>
    %11 = vector.shape_cast %10 : vector<1x16x16xf32> to vector<16x16xf32>
    %12 = arith.subf %11, %9 : vector<16x16xf32>
    %c0_8 = arith.constant 0 : index
    %c0_9 = arith.constant 0 : index
    %c0_10 = arith.constant 0 : index
    %13 = vector.load %arg3[%c0_8, %c0_9, %c0_10] : memref<1x16x16xf32, #tpu.memory_space<vmem>>, vector<1x16x16xf32>
    %14 = vector.shape_cast %13 : vector<1x16x16xf32> to vector<16x16xf32>
    %15 = arith.subf %14, %9 : vector<16x16xf32>
    %c0_11 = arith.constant 0 : index
    %c0_12 = arith.constant 0 : index
    %16 = vector.load %arg5[%c0_11, %c0_12] : memref<1x1xf32, #tpu.memory_space<vmem>>, vector<1x1xf32>
    %17 = arith.mulf %12, %12 : vector<16x16xf32>
    %18 = vector.shape_cast %17 : vector<16x16xf32> to vector<1x16x16xf32>
    %cst = arith.constant dense<0.000000e+00> : vector<1xf32>
    %19 = vector.multi_reduction <add>, %18, %cst [1, 2] : vector<1x16x16xf32> to vector<1xf32>
    %20 = vector.shape_cast %19 : vector<1xf32> to vector<1x1x1xf32>
    %21 = vector.extract %20[0, 0, 0] : f32 from vector<1x1x1xf32>
    %22 = vector.broadcast %21 : f32 to vector<1x1xf32>
    %23 = arith.addf %16, %22 : vector<1x1xf32>
    %c0_13 = arith.constant 0 : index
    %c0_14 = arith.constant 0 : index
    %24 = vector.load %arg5[%c0_13, %c0_14] : memref<1x1xf32, #tpu.memory_space<vmem>>, vector<1x1xf32>
    tpu.vector_store %arg5[%c0_13, %c0_14], %23 {strides = array<i32>} : memref<1x1xf32, #tpu.memory_space<vmem>>, vector<1x1xf32>,
    %c0_15 = arith.constant 0 : index
    %c0_16 = arith.constant 0 : index
    %25 = vector.load %arg6[%c0_15, %c0_16] : memref<1x1xf32, #tpu.memory_space<vmem>>, vector<1x1xf32>
    %26 = arith.mulf %15, %15 : vector<16x16xf32>
    %27 = vector.shape_cast %26 : vector<16x16xf32> to vector<1x16x16xf32>
    %cst_17 = arith.constant dense<0.000000e+00> : vector<1xf32>
    %28 = vector.multi_reduction <add>, %27, %cst_17 [1, 2] : vector<1x16x16xf32> to vector<1xf32>
    %29 = vector.shape_cast %28 : vector<1xf32> to vector<1x1x1xf32>
    %30 = vector.extract %29[0, 0, 0] : f32 from vector<1x1x1xf32>
    %31 = vector.broadcast %30 : f32 to vector<1x1xf32>
    %32 = arith.addf %25, %31 : vector<1x1xf32>
    %c0_18 = arith.constant 0 : index
    %c0_19 = arith.constant 0 : index
    %33 = vector.load %arg6[%c0_18, %c0_19] : memref<1x1xf32, #tpu.memory_space<vmem>>, vector<1x1xf32>
    tpu.vector_store %arg6[%c0_18, %c0_19], %32 {strides = array<i32>} : memref<1x1xf32, #tpu.memory_space<vmem>>, vector<1x1xf32>,
    %34 = arith.extui %5 : i1 to i32
    %c0_i32_20 = arith.constant 0 : i32
    %35 = arith.cmpi ne, %34, %c0_i32_20 : i32
    scf.if %35 {
      %c0_21 = arith.constant 0 : index
      %c0_22 = arith.constant 0 : index
      %36 = vector.load %arg5[%c0_21, %c0_22] : memref<1x1xf32, #tpu.memory_space<vmem>>, vector<1x1xf32>
      %cst_23 = arith.constant 2.500000e-01 : f32
      %37 = vector.broadcast %cst_23 : f32 to vector<1x1xf32>
      %38 = arith.mulf %36, %37 : vector<1x1xf32>
      %c0_24 = arith.constant 0 : index
      %c0_25 = arith.constant 0 : index
      %39 = vector.load %arg5[%c0_24, %c0_25] : memref<1x1xf32, #tpu.memory_space<vmem>>, vector<1x1xf32>
      tpu.vector_store %arg5[%c0_24, %c0_25], %38 {strides = array<i32>} : memref<1x1xf32, #tpu.memory_space<vmem>>, vector<1x1xf32>,
      %c0_26 = arith.constant 0 : index
      %c0_27 = arith.constant 0 : index
      %40 = vector.load %arg6[%c0_26, %c0_27] : memref<1x1xf32, #tpu.memory_space<vmem>>, vector<1x1xf32>
      %cst_28 = arith.constant 2.500000e-01 : f32
      %41 = vector.broadcast %cst_28 : f32 to vector<1x1xf32>
      %42 = arith.mulf %40, %41 : vector<1x1xf32>
      %c0_29 = arith.constant 0 : index
      %c0_30 = arith.constant 0 : index
      %43 = vector.load %arg6[%c0_29, %c0_30] : memref<1x1xf32, #tpu.memory_space<vmem>>, vector<1x1xf32>
      tpu.vector_store %arg6[%c0_29, %c0_30], %42 {strides = array<i32>} : memref<1x1xf32, #tpu.memory_space<vmem>>, vector<1x1xf32>,
    } else {
    }
    return
  }
  func.func @transform_0(%arg0: i32, %arg1: i32) -> (i32, i32, i32) {
    %c0_i32 = arith.constant 0 : i32
    %c0_i32_0 = arith.constant 0 : i32
    return %arg0, %arg1, %c0_i32 : i32, i32, i32
  }
  func.func @transform_1(%arg0: i32, %arg1: i32) -> (i32, i32, i32) {
    %c0_i32 = arith.constant 0 : i32
    %c0_i32_0 = arith.constant 0 : i32
    return %arg0, %arg1, %c0_i32 : i32, i32, i32
  }
  func.func @transform_2(%arg0: i32, %arg1: i32) -> (i32, i32, i32) {
    %c0_i32 = arith.constant 0 : i32
    %c0_i32_0 = arith.constant 0 : i32
    return %arg0, %arg1, %c0_i32 : i32, i32, i32
  }
  func.func @transform_3(%arg0: i32, %arg1: i32) -> (i32, i32) {
    %c0_i32 = arith.constant 0 : i32
    %c0_i32_0 = arith.constant 0 : i32
    %c0_i32_1 = arith.constant 0 : i32
    return %c0_i32, %c0_i32_0 : i32, i32
  }
  func.func @transform_4(%arg0: i32, %arg1: i32) -> (i32, i32) {
    %c0_i32 = arith.constant 0 : i32
    %c0_i32_0 = arith.constant 0 : i32
    %c0_i32_1 = arith.constant 0 : i32
    return %c0_i32, %c0_i32_0 : i32, i32
  }
}

</mosaic_0001>

<llo_original>
// kernel: custom-call.10
$region0: #{custom-call.10}
  %s0 = inlined_call_operand.vmem [shape: s32[4,2], index: 0, kind: output, shape index: {}]

// kernel: _criterion_forward.3
$region0: #{_criterion_forward.3}
  #allocation0 [shape = 'u32[]', space=smem, size = 0x4, offset = 0x4, fixed_abs, tag = 'smem constant byte address 0x4 - core index']
  #allocation1 [shape = 'u32[144,128]{1,0:T(1,128)}', space=vmem, size = 0x12000, scoped, tag = 'internal scratch']
  %s0 = inlined_call_operand.vmem [shape: f32[2,2,8], index: 0, kind: input, shape index: {}]
  %s1 = inlined_call_operand.vmem [shape: f32[2,2,8], index: 1, kind: input, shape index: {}]
  %s2 = inlined_call_operand.vmem [shape: f32[2,2,4], index: 2, kind: input, shape index: {}]
  %s3 = inlined_call_operand.vmem [shape: s32[2,4], index: 3, kind: input, shape index: {}]
  %s4 = inlined_call_operand.vmem [shape: f32[2,4,8], index: 4, kind: output, shape index: {}]
  %s5 = sld [smem:[#allocation0]]
  $region26: #{_criterion_forward.3} parent=0
    _
  %s7 = ssub.s32 1, %s5
  %s8 = scalar_select 0, %s7, %s5
  // Predicated region
  $region2: #{_criterion_forward.3} parent=0 // pred_check
    _
  $region3: #{_criterion_forward.3} parent=0 // pred_check_branch
    %10 = sbr.rel (0) target = $region5
  $region4: #{_criterion_forward.3} parent=0 // pred_region
    _
  $region5: #{_criterion_forward.3} parent=0 // pred_fallthru
    _
  // Predicated region
  $region6: #{_criterion_forward.3} parent=0 // pred_check
    _
  $region7: #{_criterion_forward.3} parent=0 // pred_check_branch
    %12 = sbr.rel (0) target = $region9
  $region8: #{_criterion_forward.3} parent=0 // pred_region
    _
  $region9: #{_criterion_forward.3} parent=0 // pred_fallthru
    _
  // Predicated region
  $region10: #{_criterion_forward.3} parent=0 // pred_check
    _
  $region11: #{_criterion_forward.3} parent=0 // pred_check_branch
    %14 = sbr.rel (0) target = $region13
  $region12: #{_criterion_forward.3} parent=0 // pred_region
    _
  $region13: #{_criterion_forward.3} parent=0 // pred_fallthru
    _
  // Predicated region
  $region14: #{_criterion_forward.3} parent=0 // pred_check
    _
  $region15: #{_criterion_forward.3} parent=0 // pred_check_branch
    %16 = sbr.rel (0) target = $region17
  $region16: #{_criterion_forward.3} parent=0 // pred_region
    _
  $region17: #{_criterion_forward.3} parent=0 // pred_fallthru
    _
  %v17 = vld [vmem:[%s0] sm:$0x3]
  %s18 = scalar_lea.vmem %s0, 2
  %v19 = vld [vmem:[%s18] sm:$0x3]
  %v20 = vmax.f32 %v17, %v19
  %v21 = vsub.f32 %v17, %v20
  %v22 = vmul.f32 %v21, 1.442695
  %v23 = vpow.pop %v22
  %v24 = vsub.f32 %v19, %v20
  %v25 = vmul.f32 %v24, 1.442695
  %v26 = vpow.pop %v25
  %v27 = vadd.f32 %v23, %v26
  %v28 = vrcp.pop %v27
  %v29 = vmul.f32 1.0, %v28
  %v30 = vld [vmem:[%s3] sm:$0x3]
  %vm31 = vcmp.eq.s32.totalorder %v30, 0
  %v32 = vsel %vm31, 1, 0
  %v33 = vcvt.s32.f32 %v32
  %v34 = vlaneseq
  %v35 = vshrl.u32 %v34, 7
  %v36 = vsub.s32 0, %v35
  %v37 = vrot.slane %v33, %v36
  %39 = vbcast.lane.b32.xlu0 %v37, 256
  %v40 = vpop.permute.xlu0 %39
  %v41 = vlaneseq
  %v42 = vshrl.u32 %v41, 7
  %v43 = vsub.s32 1, %v42
  %v44 = vrot.slane %v33, %v43
  %46 = vbcast.lane.b32.xlu0 %v44, 256
  %v47 = vpop.permute.xlu0 %46
  %v48 = vmul.f32 %v23, %v29
  %v51 = vunpack.c.l.s4 1966171168
  %v52 = vunpack.c.0.s8 %v51
  %v53 = vlaneseq
  %v54 = vshrl.u32 %v53, 7
  %v55 = vsub.s32 %v52, %v54
  %v56 = vrot.slane %v48, %v55
  %v57 = vcombine.high %v56, %v56
  %v59 = vunpack.c.l.s4 1966171168
  %v60 = vunpack.c.0.s8 %v59
  %v61 = vlaneseq
  %v62 = vshrl.u32 %v61, 7
  %v63 = vsub.s32 %v60, %v62
  %v64 = vrot.slane %v56, %v63
  %v66 = vunpack.c.l.s4 1966171168
  %v67 = vunpack.c.0.s8 %v66
  %v68 = vlaneseq
  %v69 = vshrl.u32 %v68, 7
  %v70 = vsub.s32 %v67, %v69
  %v71 = vrot.slane %v57, %v70
  %v72 = vlaneseq
  %v73 = vshrl.u32 %v72, 7
  %v74 = vsub.s32 0, %v73
  %v75 = vrot.slane %v64, %v74
  %v76 = vlaneseq
  %v77 = vshrl.u32 %v76, 7
  %v78 = vsub.s32 0, %v77
  %v79 = vrot.slane %v71, %v78
  %v82 = vmul.f32 %v40, %v75
  %v83 = vmul.f32 %v47, %v79
  %v84 = vadd.f32 %v82, 0.0
  %v85 = vadd.f32 %v83, 0.0
  %vm86 = vcmp.eq.s32.totalorder %v30, 1
  %v87 = vsel %vm86, 1, 0
  %v88 = vcvt.s32.f32 %v87
  %v89 = vlaneseq
  %v90 = vshrl.u32 %v89, 7
  %v91 = vsub.s32 0, %v90
  %v92 = vrot.slane %v88, %v91
  %94 = vbcast.lane.b32.xlu0 %v92, 256
  %v95 = vpop.permute.xlu0 %94
  %v96 = vlaneseq
  %v97 = vshrl.u32 %v96, 7
  %v98 = vsub.s32 1, %v97
  %v99 = vrot.slane %v88, %v98
  %101 = vbcast.lane.b32.xlu0 %v99, 256
  %v102 = vpop.permute.xlu0 %101
  %v103 = vmul.f32 %v26, %v29
  %v106 = vunpack.c.l.s4 1966171168
  %v107 = vunpack.c.0.s8 %v106
  %v108 = vlaneseq
  %v109 = vshrl.u32 %v108, 7
  %v110 = vsub.s32 %v107, %v109
  %v111 = vrot.slane %v103, %v110
  %v112 = vcombine.high %v111, %v111
  %v114 = vunpack.c.l.s4 1966171168
  %v115 = vunpack.c.0.s8 %v114
  %v116 = vlaneseq
  %v117 = vshrl.u32 %v116, 7
  %v118 = vsub.s32 %v115, %v117
  %v119 = vrot.slane %v111, %v118
  %v121 = vunpack.c.l.s4 1966171168
  %v122 = vunpack.c.0.s8 %v121
  %v123 = vlaneseq
  %v124 = vshrl.u32 %v123, 7
  %v125 = vsub.s32 %v122, %v124
  %v126 = vrot.slane %v112, %v125
  %v127 = vlaneseq
  %v128 = vshrl.u32 %v127, 7
  %v129 = vsub.s32 0, %v128
  %v130 = vrot.slane %v119, %v129
  %v131 = vlaneseq
  %v132 = vshrl.u32 %v131, 7
  %v133 = vsub.s32 0, %v132
  %v134 = vrot.slane %v126, %v133
  %v137 = vmul.f32 %v95, %v130
  %v138 = vmul.f32 %v102, %v134
  %v139 = vadd.f32 %v84, %v137
  %v140 = vadd.f32 %v85, %v138
  %v141 = vld [vmem:[%s1] sm:$0x3]
  %s142 = scalar_lea.vmem %s1, 2
  %v143 = vld [vmem:[%s142] sm:$0x3]
  %v144 = vld [vmem:[%s2] sm:$0x3]
  %s145 = scalar_lea.vmem %s2, 2
  %v146 = vld [vmem:[%s145] sm:$0x3]
  %v147 = vlaneseq
  %v148 = vshrl.u32 %v147, 7
  %v149 = vsub.s32 0, %v148
  %v150 = vrot.slane %v144, %v149
  %152 = vbcast.lane.b32.xlu0 %v150, 256
  %v153 = vpop.permute.xlu0 %152
  %v154 = vlaneseq
  %v155 = vshrl.u32 %v154, 7
  %v156 = vsub.s32 1, %v155
  %v157 = vrot.slane %v144, %v156
  %159 = vbcast.lane.b32.xlu0 %v157, 256
  %v160 = vpop.permute.xlu0 %159
  %v163 = vunpack.c.l.s4 1966171168
  %v164 = vunpack.c.0.s8 %v163
  %v165 = vlaneseq
  %v166 = vshrl.u32 %v165, 7
  %v167 = vsub.s32 %v164, %v166
  %v168 = vrot.slane %v141, %v167
  %v169 = vcombine.high %v168, %v168
  %v171 = vunpack.c.l.s4 1966171168
  %v172 = vunpack.c.0.s8 %v171
  %v173 = vlaneseq
  %v174 = vshrl.u32 %v173, 7
  %v175 = vsub.s32 %v172, %v174
  %v176 = vrot.slane %v168, %v175
  %v178 = vunpack.c.l.s4 1966171168
  %v179 = vunpack.c.0.s8 %v178
  %v180 = vlaneseq
  %v181 = vshrl.u32 %v180, 7
  %v182 = vsub.s32 %v179, %v181
  %v183 = vrot.slane %v169, %v182
  %v184 = vlaneseq
  %v185 = vshrl.u32 %v184, 7
  %v186 = vsub.s32 0, %v185
  %v187 = vrot.slane %v176, %v186
  %v188 = vlaneseq
  %v189 = vshrl.u32 %v188, 7
  %v190 = vsub.s32 0, %v189
  %v191 = vrot.slane %v183, %v190
  %v194 = vsub.f32 %v153, %v187
  %v195 = vsub.f32 %v160, %v191
  %v196 = vlaneseq
  %v197 = vshrl.u32 %v196, 7
  %v198 = vsub.s32 0, %v197
  %v199 = vrot.slane %v146, %v198
  %201 = vbcast.lane.b32.xlu0 %v199, 256
  %v202 = vpop.permute.xlu0 %201
  %v203 = vlaneseq
  %v204 = vshrl.u32 %v203, 7
  %v205 = vsub.s32 1, %v204
  %v206 = vrot.slane %v146, %v205
  %208 = vbcast.lane.b32.xlu0 %v206, 256
  %v209 = vpop.permute.xlu0 %208
  %v212 = vunpack.c.l.s4 1966171168
  %v213 = vunpack.c.0.s8 %v212
  %v214 = vlaneseq
  %v215 = vshrl.u32 %v214, 7
  %v216 = vsub.s32 %v213, %v215
  %v217 = vrot.slane %v143, %v216
  %v218 = vcombine.high %v217, %v217
  %v220 = vunpack.c.l.s4 1966171168
  %v221 = vunpack.c.0.s8 %v220
  %v222 = vlaneseq
  %v223 = vshrl.u32 %v222, 7
  %v224 = vsub.s32 %v221, %v223
  %v225 = vrot.slane %v217, %v224
  %v227 = vunpack.c.l.s4 1966171168
  %v228 = vunpack.c.0.s8 %v227
  %v229 = vlaneseq
  %v230 = vshrl.u32 %v229, 7
  %v231 = vsub.s32 %v228, %v230
  %v232 = vrot.slane %v218, %v231
  %v233 = vlaneseq
  %v234 = vshrl.u32 %v233, 7
  %v235 = vsub.s32 0, %v234
  %v236 = vrot.slane %v225, %v235
  %v237 = vlaneseq
  %v238 = vshrl.u32 %v237, 7
  %v239 = vsub.s32 0, %v238
  %v240 = vrot.slane %v232, %v239
  %v243 = vsub.f32 %v202, %v236
  %v244 = vsub.f32 %v209, %v240
  %v245 = vmul.f32 %v194, %v194
  %v246 = vmul.f32 %v195, %v195
  %v247 = vmul.f32 %v243, %v243
  %v248 = vmul.f32 %v244, %v244
  %v249 = vadd.f32 %v245, %v247
  %v250 = vadd.f32 %v246, %v248
  %v251 = vrsqrt.pop %v249
  %v252 = vmul.f32 %v249, %v251
  %vm253 = vcmp.eq.f32.partialorder %v249, inf
  %v254 = vsel %vm253, %v249, %v252
  %vm255 = vcmp.eq.f32.partialorder %v249, 0.0
  %v256 = vand.u32 %v249, 2147483648
  %v257 = vsel %vm255, %v256, %v254
  %v258 = vrsqrt.pop %v250
  %v259 = vmul.f32 %v250, %v258
  %vm260 = vcmp.eq.f32.partialorder %v250, inf
  %v261 = vsel %vm260, %v250, %v259
  %vm262 = vcmp.eq.f32.partialorder %v250, 0.0
  %v263 = vand.u32 %v250, 2147483648
  %v264 = vsel %vm262, %v263, %v261
  %v265 = vmul.f32 %v139, -1.0
  %v266 = vmul.f32 %v140, -1.0
  %v267 = vmul.f32 %v257, 0.05
  %v268 = vmul.f32 %v264, 0.05
  %v269 = vadd.f32 %v265, %v267
  %v270 = vadd.f32 %v266, %v268
  %vm271 = vcmask 60416
  %272 = vst.msk [vmem:[%s4] sm:$0xf] %vm271, %v269
  %273 = vst.msk [vmem:[%s4 + $0x4] sm:$0xf] %vm271, %v270
  // Predicated region
  $region18: #{_criterion_forward.3} parent=0 // pred_check
    _
  $region19: #{_criterion_forward.3} parent=0 // pred_check_branch
    %275 = sbr.rel (0) target = $region21
  $region20: #{_criterion_forward.3} parent=0 // pred_region
    _
  $region21: #{_criterion_forward.3} parent=0 // pred_fallthru
    _
  // Predicated region
  $region22: #{_criterion_forward.3} parent=0 // pred_check
    _
  $region23: #{_criterion_forward.3} parent=0 // pred_check_branch
    %277 = sbr.rel (0) target = $region25
  $region24: #{_criterion_forward.3} parent=0 // pred_region
    _
  $region25: #{_criterion_forward.3} parent=0 // pred_fallthru
    _

// kernel: _criterion_forward.4
$region0: #{_criterion_forward.4}
  #allocation0 [shape = 'u32[]', space=smem, size = 0x4, offset = 0x4, fixed_abs, tag = 'smem constant byte address 0x4 - core index']
  #allocation1 [shape = 'u32[144,128]{1,0:T(1,128)}', space=vmem, size = 0x12000, scoped, tag = 'internal scratch']
  %s0 = inlined_call_operand.vmem [shape: f32[2,2,8], index: 0, kind: input, shape index: {}]
  %s1 = inlined_call_operand.vmem [shape: s32[2,8], index: 1, kind: input, shape index: {}]
  %s2 = inlined_call_operand.vmem [shape: f32[2,2,8], index: 2, kind: input, shape index: {}]
  %s3 = inlined_call_operand.vmem [shape: f32[2,2,8], index: 3, kind: input, shape index: {}]
  %s4 = inlined_call_operand.vmem [shape: f32[2,8], index: 4, kind: input, shape index: {}]
  %s5 = inlined_call_operand.hbm [shape: f32[1,1], index: 5, kind: output, shape index: {0}]
  %s6 = inlined_call_operand.hbm [shape: f32[1,1], index: 6, kind: output, shape index: {1}]
  %7 = xla_tuple %s5, %s6
  %s8 = sld [smem:[#allocation0]]
  $region38: #{_criterion_forward.4} parent=0
    _
  %s10 = ssub.s32 1, %s8
  %s11 = scalar_select 0, %s10, %s8
  $region1: #{_criterion_forward.4} parent=0
    #allocation2 [shape = 'u8[512]{0}', space=vmem, size = 0x400, scoped, tag = 'output window, operand 0, single buffered']
    #allocation3 [shape = 's32[1]{0}', space=sflag, size = 0x4, scoped, tag = 'scoped memory for _criterion_forward.4']
    #allocation4 [shape = 'u8[512]{0}', space=vmem, size = 0x400, scoped, tag = 'output window, operand 1, single buffered']
    #allocation5 [shape = 's32[1]{0}', space=sflag, size = 0x4, scoped, tag = 'scoped memory for _criterion_forward.4']
    %12 = vsyncpa [#allocation3], 0
    %13 = vsyncpa [#allocation5], 0
    // Predicated region
    $region2: #{_criterion_forward.4} parent=1 // pred_check
      _
    $region3: #{_criterion_forward.4} parent=1 // pred_check_branch
      %15 = sbr.rel (0) target = $region5
    $region4: #{_criterion_forward.4} parent=1 // pred_region
      _
    $region5: #{_criterion_forward.4} parent=1 // pred_fallthru
      _
    // Predicated region
    $region6: #{_criterion_forward.4} parent=1 // pred_check
      _
    $region7: #{_criterion_forward.4} parent=1 // pred_check_branch
      %17 = sbr.rel (0) target = $region9
    $region8: #{_criterion_forward.4} parent=1 // pred_region
      _
    $region9: #{_criterion_forward.4} parent=1 // pred_fallthru
      _
    // Predicated region
    $region10: #{_criterion_forward.4} parent=1 // pred_check
      _
    $region11: #{_criterion_forward.4} parent=1 // pred_check_branch
      %19 = sbr.rel (0) target = $region13
    $region12: #{_criterion_forward.4} parent=1 // pred_region
      _
    $region13: #{_criterion_forward.4} parent=1 // pred_fallthru
      _
    // Predicated region
    $region14: #{_criterion_forward.4} parent=1 // pred_check
      _
    $region15: #{_criterion_forward.4} parent=1 // pred_check_branch
      %21 = sbr.rel (0) target = $region17
    $region16: #{_criterion_forward.4} parent=1 // pred_region
      _
    $region17: #{_criterion_forward.4} parent=1 // pred_fallthru
      _
    // Predicated region
    $region18: #{_criterion_forward.4} parent=1 // pred_check
      _
    $region19: #{_criterion_forward.4} parent=1 // pred_check_branch
      %23 = sbr.rel (0) target = $region21
    $region20: #{_criterion_forward.4} parent=1 // pred_region
      _
    $region21: #{_criterion_forward.4} parent=1 // pred_fallthru
      _
    %v24 = vld [vmem:[%s0] sm:$0x3]
    %s25 = scalar_lea.vmem %s0, 2
    %v26 = vld [vmem:[%s25] sm:$0x3]
    %v27 = vmax.f32 %v24, %v26
    %v28 = vsub.f32 %v24, %v27
    %v29 = vmul.f32 %v28, 1.442695
    %v30 = vpow.pop %v29
    %v31 = vsub.f32 %v26, %v27
    %v32 = vmul.f32 %v31, 1.442695
    %v33 = vpow.pop %v32
    %v34 = vadd.f32 %v30, %v33
    %v35 = vlog2.pop %v34
    %v36 = vmul.f32 %v35, 0.6931472
    %v37 = vadd.f32 %v27, %v36
    %v38 = vld [vmem:[%s1] sm:$0x3]
    %vm39 = vcmp.eq.s32.totalorder %v38, 0
    %v40 = vsel %vm39, %v24, 0.0
    %v41 = vadd.f32 %v40, 0.0
    %vm42 = vcmp.eq.s32.totalorder %v38, 1
    %v43 = vsel %vm42, %v26, 0.0
    %v44 = vadd.f32 %v41, %v43
    %v45 = vsub.f32 %v37, %v44
    %v46 = vsel %vm39, 0.5, 1.0
    %v47 = vmul.f32 %v46, %v45
    %vm48 = vcmask 58368
    %v49 = vsel %vm48, %v47, 0.0
    %50 = vadd.xlane.f32.xlu0 %v49
    %v51 = vpop.xlane.xlu0 %50
    %v52 = vrot.slane %v51, 4
    %v53 = vadd.f32 %v51, %v52
    %v54 = vrot.slane %v53, 2
    %v55 = vadd.f32 %v53, %v54
    %v56 = vrot.slane %v55, 1
    %v57 = vadd.f32 %v55, %v56
    %s58 = vtos %v57
    %v59 = vstv %s58
    %v60 = vsel %vm48, %v46, 0.0
    %61 = vadd.xlane.f32.xlu0 %v60
    %v62 = vpop.xlane.xlu0 %61
    %v63 = vrot.slane %v62, 4
    %v64 = vadd.f32 %v62, %v63
    %v65 = vrot.slane %v64, 2
    %v66 = vadd.f32 %v64, %v65
    %v67 = vrot.slane %v66, 1
    %v68 = vadd.f32 %v66, %v67
    %s69 = vtos %v68
    %v70 = vstv %s69
    %v71 = vrcp.pop %v70
    %v72 = vmul.f32 %v59, %v71
    %vm73 = vcmask 0
    %74 = vst.msk [vmem:[#allocation2] sm:$0x1] %vm73, %v72
    %v75 = vld [vmem:[%s2] sm:$0x3]
    %v76 = vld [vmem:[%s3] sm:$0x3]
    %v77 = vsub.f32 %v75, %v76
    %s78 = scalar_lea.vmem %s2, 2
    %v79 = vld [vmem:[%s78] sm:$0x3]
    %s80 = scalar_lea.vmem %s3, 2
    %v81 = vld [vmem:[%s80] sm:$0x3]
    %v82 = vsub.f32 %v79, %v81
    %v83 = vld [vmem:[%s4] sm:$0x3]
    %v84 = vmul.f32 %v77, %v77
    %v85 = vmul.f32 %v82, %v82
    %v86 = vadd.f32 %v84, %v85
    %v87 = vmul.f32 %v83, %v86
    %v88 = vsel %vm48, %v87, 0.0
    %89 = vadd.xlane.f32.xlu0 %v88
    %v90 = vpop.xlane.xlu0 %89
    %v91 = vrot.slane %v90, 4
    %v92 = vadd.f32 %v90, %v91
    %v93 = vrot.slane %v92, 2
    %v94 = vadd.f32 %v92, %v93
    %v95 = vrot.slane %v94, 1
    %v96 = vadd.f32 %v94, %v95
    %s97 = vtos %v96
    %v98 = vstv %s97
    %v99 = vrcp.pop 8.0
    %v100 = vmul.f32 %v98, %v99
    %101 = vst.msk [vmem:[#allocation4] sm:$0x1] %vm73, %v100
    // Predicated region
    $region22: #{_criterion_forward.4} parent=1 // pred_check
      _
    $region23: #{_criterion_forward.4} parent=1 // pred_check_branch
      %103 = sbr.rel (0) target = $region25
    $region24: #{_criterion_forward.4} parent=1 // pred_region
      %s105 = ssub.s32 16, 16
      %106 = vsyncadd [#allocation3], %s105
      %s108 = sshll.u32 [#allocation2], 4
      %s109 = int_to_ptr.vmem [resolvable:$true] %s108
      %111 = dma.vmem_to_hbm [thread:$0]  %s109, 16, %s5, [#allocation3]
    $region25: #{_criterion_forward.4} parent=1 // pred_fallthru
      _
    // Predicated region
    $region26: #{_criterion_forward.4} parent=1 // pred_check
      _
    $region27: #{_criterion_forward.4} parent=1 // pred_check_branch
      %113 = sbr.rel (0) target = $region29
    $region28: #{_criterion_forward.4} parent=1 // pred_region
      %s115 = ssub.s32 16, 16
      %116 = vsyncadd [#allocation5], %s115
      %s118 = sshll.u32 [#allocation4], 4
      %s119 = int_to_ptr.vmem [resolvable:$true] %s118
      %121 = dma.vmem_to_hbm [thread:$0]  %s119, 16, %s6, [#allocation5]
    $region29: #{_criterion_forward.4} parent=1 // pred_fallthru
      _
    // Predicated region
    $region30: #{_criterion_forward.4} parent=1 // pred_check
      _
    $region31: #{_criterion_forward.4} parent=1 // pred_check_branch
      %123 = sbr.rel (0) target = $region33
    $region32: #{_criterion_forward.4} parent=1 // pred_region
      %124 = dma.done [#allocation3], 16
    $region33: #{_criterion_forward.4} parent=1 // pred_fallthru
      _
    // Predicated region
    $region34: #{_criterion_forward.4} parent=1 // pred_check
      _
    $region35: #{_criterion_forward.4} parent=1 // pred_check_branch
      %126 = sbr.rel (0) target = $region37
    $region36: #{_criterion_forward.4} parent=1 // pred_region
      %127 = dma.done [#allocation5], 16
    $region37: #{_criterion_forward.4} parent=1 // pred_fallthru
      _
    %128 = vsyncpa [#allocation3], 1
    %129 = vsyncpa [#allocation5], 1

// kernel: _criterion_forward.5
$region0: #{_criterion_forward.5}
  #allocation0 [shape = 'u32[]', space=smem, size = 0x4, offset = 0x4, fixed_abs, tag = 'smem constant byte address 0x4 - core index']
  #allocation1 [shape = 'u32[144,128]{1,0:T(1,128)}', space=vmem, size = 0x12000, scoped, tag = 'internal scratch']
  %s0 = inlined_call_operand.vmem [shape: f32[2,16,16], index: 0, kind: input, shape index: {}]
  %s1 = inlined_call_operand.vmem [shape: f32[2,16,16], index: 1, kind: input, shape index: {}]
  %s2 = inlined_call_operand.vmem [shape: f32[2,16,16], index: 2, kind: input, shape index: {}]
  %s3 = inlined_call_operand.hbm [shape: f32[1,1], index: 3, kind: output, shape index: {0}]
  %s4 = inlined_call_operand.hbm [shape: f32[1,1], index: 4, kind: output, shape index: {1}]
  %5 = xla_tuple %s3, %s4
  %s6 = sld [smem:[#allocation0]]
  $region61: #{_criterion_forward.5} parent=0
    _
  %s8 = ssub.s32 1, %s6
  %s9 = scalar_select 0, %s8, %s6
  $region1: #{_criterion_forward.5} parent=0
    #allocation2 [shape = 'u8[512]{0}', space=vmem, size = 0x400, scoped, tag = 'output window, operand 0, single buffered']
    #allocation3 [shape = 's32[2]{0}', space=sflag, size = 0x8, scoped, tag = 'scoped memory for _criterion_forward.5']
    #allocation4 [shape = 'u8[512]{0}', space=vmem, size = 0x400, scoped, tag = 'output window, operand 1, single buffered']
    #allocation5 [shape = 's32[1]{0}', space=sflag, size = 0x4, scoped, tag = 'scoped memory for _criterion_forward.5']
    %10 = vsyncpa [#allocation3], 0
    %11 = vsyncpa [#allocation5], 0
    loop: start=0, step=1, limit=4
    $region2: #{_criterion_forward.5} parent=1 // loop_pre_header
      _
    $region3: #{_criterion_forward.5} parent=1 // loop_header
      %s13 = sphi 0, %s17
      %p14 = scmp.ge.s32.totalorder %s13, 4
      %s20 = sphi 0, %s32
      %s21 = sphi 0, %s28
      %s22 = sphi 0, %s20
      %s23 = sphi 0, %s21
      %s24 = sphi 0, %s22
      %s25 = sphi 0, %s23
      %s37 = sphi 0, %s39
      %s40 = sphi 0, %s37
      %s41 = sphi 0, %s40
      %s57 = sphi 0, %s41
      %s65 = sphi 0, %s67
      %s68 = sphi 0, %s65
      %s69 = sphi 0, %s68
      %s85 = sphi 0, %s69
      %s93 = sphi 0, %s95
      %s96 = sphi 0, %s93
      %s97 = sphi 0, %s96
      %s113 = sphi 0, %s97
      %s117 = sphi 0, %s117
      %s119 = sphi 0, %s117
      %s120 = sphi 0, %s119
      %s134 = sphi 0, %s120
      %s138 = sphi 0, %s138
      %s140 = sphi 0, %s138
      %s141 = sphi 0, %s140
      %s155 = sphi 0, %s141
    $region4: #{_criterion_forward.5} parent=1 // loop_header_branch
      %16 = sbr.rel (%p14) target = $region8
    $region5: #{_criterion_forward.5} parent=1 // loop_body
      %s18 = ssub.s32 %s13, 1
      %s19 = ssub.s32 %s13, 2
      %s26 = sadd.s32 1, %s21
      %p27 = scmp.ge.s32.totalorder %s26, 1
      %s28 = scalar_select %p27, 0, %s26
      %s29 = sadd.s32 1, %s20
      %s30 = scalar_select %p27, %s29, %s20
      %p31 = scmp.ge.s32.totalorder %s30, 2
      %s32 = scalar_select %p31, 0, %s30
      %s33 = ssub.s32 %s20, %s32
      %s34 = ssub.s32 %s21, %s28
      %s35 = sor.u32 %s33, %s34
      %p36 = scmp.eq.s32.totalorder %s35, 0
      %s38 = sadd.s32 %s37, 1
      %s39 = scalar_select %p36, %s37, %s38
      %p42 = pneg %p36
      %p43 = scmp.eq.s32.totalorder %s13, 1
      %p44 = por %p42, %p43
      %p45 = scmp.ne.s32.totalorder %s37, %s40
      %p46 = scmp.eq.s32.totalorder %s13, 0
      %p47 = por %p45, %p46
      %p48 = scmp.ne.s32.totalorder %s37, %s40
      %p49 = scmp.eq.s32.totalorder %s18, 1
      %p50 = por %p48, %p49
      %p51 = scmp.ne.s32.totalorder %s40, %s41
      %p52 = scmp.eq.s32.totalorder %s18, 0
      %p53 = por %p51, %p52
      %p54 = scmp.ne.s32.totalorder %s40, %s41
      %p55 = scmp.eq.s32.totalorder %s19, 1
      %p56 = por %p54, %p55
      %p58 = scmp.ne.s32.totalorder %s41, %s57
      %p59 = scmp.eq.s32.totalorder %s19, 0
      %p60 = por %p58, %p59
      %s61 = ssub.s32 %s20, %s32
      %s62 = ssub.s32 %s21, %s28
      %s63 = sor.u32 %s61, %s62
      %p64 = scmp.eq.s32.totalorder %s63, 0
      %s66 = sadd.s32 %s65, 1
      %s67 = scalar_select %p64, %s65, %s66
      %p70 = pneg %p64
      %p71 = scmp.eq.s32.totalorder %s13, 1
      %p72 = por %p70, %p71
      %p73 = scmp.ne.s32.totalorder %s65, %s68
      %p74 = scmp.eq.s32.totalorder %s13, 0
      %p75 = por %p73, %p74
      %p76 = scmp.ne.s32.totalorder %s65, %s68
      %p77 = scmp.eq.s32.totalorder %s18, 1
      %p78 = por %p76, %p77
      %p79 = scmp.ne.s32.totalorder %s68, %s69
      %p80 = scmp.eq.s32.totalorder %s18, 0
      %p81 = por %p79, %p80
      %p82 = scmp.ne.s32.totalorder %s68, %s69
      %p83 = scmp.eq.s32.totalorder %s19, 1
      %p84 = por %p82, %p83
      %p86 = scmp.ne.s32.totalorder %s69, %s85
      %p87 = scmp.eq.s32.totalorder %s19, 0
      %p88 = por %p86, %p87
      %s89 = ssub.s32 %s20, %s32
      %s90 = ssub.s32 %s21, %s28
      %s91 = sor.u32 %s89, %s90
      %p92 = scmp.eq.s32.totalorder %s91, 0
      %s94 = sadd.s32 %s93, 1
      %s95 = scalar_select %p92, %s93, %s94
      %p98 = pneg %p92
      %p99 = scmp.eq.s32.totalorder %s13, 1
      %p100 = por %p98, %p99
      %p101 = scmp.ne.s32.totalorder %s93, %s96
      %p102 = scmp.eq.s32.totalorder %s13, 0
      %p103 = por %p101, %p102
      %p104 = scmp.ne.s32.totalorder %s93, %s96
      %p105 = scmp.eq.s32.totalorder %s18, 1
      %p106 = por %p104, %p105
      %p107 = scmp.ne.s32.totalorder %s96, %s97
      %p108 = scmp.eq.s32.totalorder %s18, 0
      %p109 = por %p107, %p108
      %p110 = scmp.ne.s32.totalorder %s96, %s97
      %p111 = scmp.eq.s32.totalorder %s19, 1
      %p112 = por %p110, %p111
      %p114 = scmp.ne.s32.totalorder %s97, %s113
      %p115 = scmp.eq.s32.totalorder %s19, 0
      %p116 = por %p114, %p115
      %s118 = sadd.s32 %s117, 1
      %p121 = scmp.eq.s32.totalorder %s13, 1
      %p122 = scmp.ne.s32.totalorder %s117, %s119
      %p123 = scmp.eq.s32.totalorder %s13, 0
      %p124 = por %p122, %p123
      %p125 = scmp.ne.s32.totalorder %s117, %s119
      %p126 = scmp.eq.s32.totalorder %s18, 1
      %p127 = por %p125, %p126
      %p128 = scmp.ne.s32.totalorder %s119, %s120
      %p129 = scmp.eq.s32.totalorder %s18, 0
      %p130 = por %p128, %p129
      %p131 = scmp.ne.s32.totalorder %s119, %s120
      %p132 = scmp.eq.s32.totalorder %s19, 1
      %p133 = por %p131, %p132
      %p135 = scmp.ne.s32.totalorder %s120, %s134
      %p136 = scmp.eq.s32.totalorder %s19, 0
      %p137 = por %p135, %p136
      %s139 = sadd.s32 %s138, 1
      %p142 = scmp.eq.s32.totalorder %s13, 1
      %p143 = scmp.ne.s32.totalorder %s138, %s140
      %p144 = scmp.eq.s32.totalorder %s13, 0
      %p145 = por %p143, %p144
      %p146 = scmp.ne.s32.totalorder %s138, %s140
      %p147 = scmp.eq.s32.totalorder %s18, 1
      %p148 = por %p146, %p147
      %p149 = scmp.ne.s32.totalorder %s140, %s141
      %p150 = scmp.eq.s32.totalorder %s18, 0
      %p151 = por %p149, %p150
      %p152 = scmp.ne.s32.totalorder %s140, %s141
      %p153 = scmp.eq.s32.totalorder %s19, 1
      %p154 = por %p152, %p153
      %p156 = scmp.ne.s32.totalorder %s141, %s155
      %p157 = scmp.eq.s32.totalorder %s19, 0
      %p158 = por %p156, %p157
      %p159 = scmp.le.s32.totalorder 1, %s13
      %p160 = scmp.lt.s32.totalorder %s13, 3
      %p161 = pnand %p159, %p160
      %p162 = pneg %p161
      // Predicated region
      $region9: #{_criterion_forward.5} parent=5 // pred_check
        _
      $region10: #{_criterion_forward.5} parent=5 // pred_check_branch
        %164 = sbr.rel (%p161) target = $region12
      $region11: #{_criterion_forward.5} parent=5 // pred_region
        %s165 = ssub.s32 %s13, 1
      $region12: #{_criterion_forward.5} parent=5 // pred_fallthru
        _
      %p166 = scmp.lt.s32.totalorder %s13, 2
      // Predicated region
      $region13: #{_criterion_forward.5} parent=5 // pred_check
        %p167 = pneg %p166
      $region14: #{_criterion_forward.5} parent=5 // pred_check_branch
        %169 = sbr.rel (%p167) target = $region16
      $region15: #{_criterion_forward.5} parent=5 // pred_region
        // Predicated region
        $region17: #{_criterion_forward.5} parent=15 // pred_check
          %p170 = pneg %p47
        $region18: #{_criterion_forward.5} parent=15 // pred_check_branch
          %172 = sbr.rel (%p170) target = $region20
        $region19: #{_criterion_forward.5} parent=15 // pred_region
          %s173 = smul.u32 2, %s21
          %p174 = scmp.lt.s32.totalorder %s20, 1
          %s175 = scalar_select %p174, %s20, 1
          %p176 = scmp.lt.s32.totalorder %s173, 1
          %s177 = scalar_select %p176, %s173, 1
          %s178 = smul.addr %s175, 2
          %s179 = sadd.s32 %s177, %s178
          %s180 = smul.addr %s179, 8
          %s181 = scalar_lea.vmem %s0, %s180
          %s182 = smul.u32 2, %s21
        $region20: #{_criterion_forward.5} parent=15 // pred_fallthru
          _
        // Predicated region
        $region21: #{_criterion_forward.5} parent=15 // pred_check
          %p183 = pneg %p75
        $region22: #{_criterion_forward.5} parent=15 // pred_check_branch
          %185 = sbr.rel (%p183) target = $region24
        $region23: #{_criterion_forward.5} parent=15 // pred_region
          %s186 = smul.u32 2, %s21
          %p187 = scmp.lt.s32.totalorder %s20, 1
          %s188 = scalar_select %p187, %s20, 1
          %p189 = scmp.lt.s32.totalorder %s186, 1
          %s190 = scalar_select %p189, %s186, 1
          %s191 = smul.addr %s188, 2
          %s192 = sadd.s32 %s190, %s191
          %s193 = smul.addr %s192, 8
          %s194 = scalar_lea.vmem %s1, %s193
          %s195 = smul.u32 2, %s21
        $region24: #{_criterion_forward.5} parent=15 // pred_fallthru
          _
        // Predicated region
        $region25: #{_criterion_forward.5} parent=15 // pred_check
          %p196 = pneg %p103
        $region26: #{_criterion_forward.5} parent=15 // pred_check_branch
          %198 = sbr.rel (%p196) target = $region28
        $region27: #{_criterion_forward.5} parent=15 // pred_region
          %s199 = smul.u32 2, %s21
          %p200 = scmp.lt.s32.totalorder %s20, 1
          %s201 = scalar_select %p200, %s20, 1
          %p202 = scmp.lt.s32.totalorder %s199, 1
          %s203 = scalar_select %p202, %s199, 1
          %s204 = smul.addr %s201, 2
          %s205 = sadd.s32 %s203, %s204
          %s206 = smul.addr %s205, 8
          %s207 = scalar_lea.vmem %s2, %s206
          %s208 = smul.u32 2, %s21
        $region28: #{_criterion_forward.5} parent=15 // pred_fallthru
          _
      $region16: #{_criterion_forward.5} parent=5 // pred_fallthru
        _
      %p209 = scmp.le.s32.totalorder 1, %s13
      %p210 = scmp.lt.s32.totalorder %s13, 3
      %p211 = pnand %p209, %p210
      %p212 = pneg %p211
      // Predicated region
      $region29: #{_criterion_forward.5} parent=5 // pred_check
        _
      $region30: #{_criterion_forward.5} parent=5 // pred_check_branch
        %214 = sbr.rel (%p211) target = $region32
      $region31: #{_criterion_forward.5} parent=5 // pred_region
        %s215 = ssub.s32 %s13, 1
        %s216 = smul.u32 2, %s23
        %p217 = scmp.lt.s32.totalorder %s22, 1
        %s218 = scalar_select %p217, %s22, 1
        %p219 = scmp.lt.s32.totalorder %s216, 1
        %s220 = scalar_select %p219, %s216, 1
        %s221 = smul.addr %s218, 2
        %s222 = sadd.s32 %s220, %s221
        %s223 = smul.addr %s222, 8
        %s224 = scalar_lea.vmem %s0, %s223
        %p225 = pneg %p53
        %p226 = pneg %p50
        %s227 = smul.u32 2, %s23
        %p228 = scmp.lt.s32.totalorder %s22, 1
        %s229 = scalar_select %p228, %s22, 1
        %p230 = scmp.lt.s32.totalorder %s227, 1
        %s231 = scalar_select %p230, %s227, 1
        %s232 = smul.addr %s229, 2
        %s233 = sadd.s32 %s231, %s232
        %s234 = smul.addr %s233, 8
        %s235 = scalar_lea.vmem %s1, %s234
        %p236 = pneg %p81
        %p237 = pneg %p78
        %s238 = smul.u32 2, %s23
        %p239 = scmp.lt.s32.totalorder %s22, 1
        %s240 = scalar_select %p239, %s22, 1
        %p241 = scmp.lt.s32.totalorder %s238, 1
        %s242 = scalar_select %p241, %s238, 1
        %s243 = smul.addr %s240, 2
        %s244 = sadd.s32 %s242, %s243
        %s245 = smul.addr %s244, 8
        %s246 = scalar_lea.vmem %s2, %s245
        %p247 = pneg %p109
        %p248 = pneg %p106
        %p249 = pneg %p130
        %p250 = pneg %p127
        %p251 = pneg %p151
        %p252 = pneg %p148
        %s253 = smul.u32 2, %s23
        %p254 = scmp.lt.s32.totalorder %s22, 1
        %s255 = scalar_select %p254, %s22, 1
        %p256 = scmp.lt.s32.totalorder %s253, 1
        %s257 = scalar_select %p256, %s253, 1
        %s258 = smul.addr %s255, 2
        %s259 = sadd.s32 %s257, %s258
        %s260 = smul.addr %s259, 8
        %s261 = scalar_lea.vmem %s0, %s260
        %s262 = smul.u32 2, %s23
        %s263 = smul.u32 2, %s23
        %p264 = scmp.lt.s32.totalorder %s22, 1
        %s265 = scalar_select %p264, %s22, 1
        %p266 = scmp.lt.s32.totalorder %s263, 1
        %s267 = scalar_select %p266, %s263, 1
        %s268 = smul.addr %s265, 2
        %s269 = sadd.s32 %s267, %s268
        %s270 = smul.addr %s269, 8
        %s271 = scalar_lea.vmem %s1, %s270
        %s272 = smul.u32 2, %s23
        %s273 = smul.u32 2, %s23
        %p274 = scmp.lt.s32.totalorder %s22, 1
        %s275 = scalar_select %p274, %s22, 1
        %p276 = scmp.lt.s32.totalorder %s273, 1
        %s277 = scalar_select %p276, %s273, 1
        %s278 = smul.addr %s275, 2
        %s279 = sadd.s32 %s277, %s278
        %s280 = smul.addr %s279, 8
        %s281 = scalar_lea.vmem %s2, %s280
        %s282 = smul.u32 2, %s23
        %p283 = scmp.eq.s32.totalorder %s22, 0
        %p284 = scmp.eq.s32.totalorder %s23, 0
        %p285 = pnand %p283, %p284
        %p286 = pneg %p285
        %p287 = scmp.eq.s32.totalorder %s22, 1
        %p288 = pnand %p287, %p284
        %p289 = pneg %p288
        // Predicated region
        $region33: #{_criterion_forward.5} parent=31 // pred_check
          _
        $region34: #{_criterion_forward.5} parent=31 // pred_check_branch
          %291 = sbr.rel (%p285) target = $region36
        $region35: #{_criterion_forward.5} parent=31 // pred_region
          %vm292 = vcmask 0
          %293 = vst.msk [vmem:[#allocation2] sm:$0x1] %vm292, 0.0
          %294 = vst.msk [vmem:[#allocation4] sm:$0x1] %vm292, 0.0
        $region36: #{_criterion_forward.5} parent=31 // pred_fallthru
          _
        %v295 = vld [vmem:[%s281] sm:$0xff]
        %v296 = vld [vmem:[%s281 + $0x8] sm:$0xff]
        %v297 = vld [vmem:[%s261] sm:$0xff]
        %v298 = vld [vmem:[%s261 + $0x8] sm:$0xff]
        %v299 = vsub.f32 %v297, %v295
        %v300 = vsub.f32 %v298, %v296
        %v301 = vld [vmem:[%s271] sm:$0xff]
        %v302 = vld [vmem:[%s271 + $0x8] sm:$0xff]
        %v303 = vsub.f32 %v301, %v295
        %v304 = vsub.f32 %v302, %v296
        %v305 = vld [vmem:[#allocation2] sm:$0x1]
        %v306 = vmul.f32 %v299, %v299
        %v307 = vmul.f32 %v300, %v300
        %vm308 = vcmask 130048
        %v309 = vsel %vm308, %v306, 0.0
        %v310 = vsel %vm308, %v307, 0.0
        %v311 = vadd.f32 %v309, %v310
        %312 = vadd.xlane.f32.xlu0 %v311
        %v313 = vpop.xlane.xlu0 %312
        %v314 = vrot.slane %v313, 4
        %v315 = vadd.f32 %v313, %v314
        %v316 = vrot.slane %v315, 2
        %v317 = vadd.f32 %v315, %v316
        %v318 = vrot.slane %v317, 1
        %v319 = vadd.f32 %v317, %v318
        %s320 = vtos %v319
        %v321 = vstv %s320
        %v322 = vadd.f32 %v305, %v321
        %vm323 = vcmask 0
        %324 = vst.msk [vmem:[#allocation2] sm:$0x1] %vm323, %v322
        %v325 = vld [vmem:[#allocation4] sm:$0x1]
        %v326 = vmul.f32 %v303, %v303
        %v327 = vmul.f32 %v304, %v304
        %v328 = vsel %vm308, %v326, 0.0
        %v329 = vsel %vm308, %v327, 0.0
        %v330 = vadd.f32 %v328, %v329
        %331 = vadd.xlane.f32.xlu0 %v330
        %v332 = vpop.xlane.xlu0 %331
        %v333 = vrot.slane %v332, 4
        %v334 = vadd.f32 %v332, %v333
        %v335 = vrot.slane %v334, 2
        %v336 = vadd.f32 %v334, %v335
        %v337 = vrot.slane %v336, 1
        %v338 = vadd.f32 %v336, %v337
        %s339 = vtos %v338
        %v340 = vstv %s339
        %v341 = vadd.f32 %v325, %v340
        %342 = vst.msk [vmem:[#allocation4] sm:$0x1] %vm323, %v341
        // Predicated region
        $region37: #{_criterion_forward.5} parent=31 // pred_check
          _
        $region38: #{_criterion_forward.5} parent=31 // pred_check_branch
          %344 = sbr.rel (%p288) target = $region40
        $region39: #{_criterion_forward.5} parent=31 // pred_region
          %v345 = vld [vmem:[#allocation2] sm:$0x1]
          %v346 = vmul.f32 %v345, 0.25
          %347 = vst.msk [vmem:[#allocation2] sm:$0x1] %vm323, %v346
          %v348 = vld [vmem:[#allocation4] sm:$0x1]
          %v349 = vmul.f32 %v348, 0.25
          %350 = vst.msk [vmem:[#allocation4] sm:$0x1] %vm323, %v349
        $region40: #{_criterion_forward.5} parent=31 // pred_fallthru
          _
        // Predicated region
        $region41: #{_criterion_forward.5} parent=31 // pred_check
          %p351 = pneg %p127
        $region42: #{_criterion_forward.5} parent=31 // pred_check_branch
          %353 = sbr.rel (%p351) target = $region44
        $region43: #{_criterion_forward.5} parent=31 // pred_region
          %s355 = ssub.s32 16, 16
          %356 = vsyncadd [#allocation3], %s355
          %s358 = sshll.u32 [#allocation2], 4
          %s359 = int_to_ptr.vmem [resolvable:$true] %s358
          %361 = dma.vmem_to_hbm [thread:$0]  %s359, 16, %s3, [#allocation3]
        $region44: #{_criterion_forward.5} parent=31 // pred_fallthru
          _
        // Predicated region
        $region45: #{_criterion_forward.5} parent=31 // pred_check
          %p362 = pneg %p148
        $region46: #{_criterion_forward.5} parent=31 // pred_check_branch
          %364 = sbr.rel (%p362) target = $region48
        $region47: #{_criterion_forward.5} parent=31 // pred_region
          %s366 = ssub.s32 16, 16
          %367 = vsyncadd [#allocation5], %s366
          %s369 = sshll.u32 [#allocation4], 4
          %s370 = int_to_ptr.vmem [resolvable:$true] %s369
          %372 = dma.vmem_to_hbm [thread:$0]  %s370, 16, %s4, [#allocation5]
        $region48: #{_criterion_forward.5} parent=31 // pred_fallthru
          _
        // Predicated region
        $region49: #{_criterion_forward.5} parent=31 // pred_check
          %p373 = pneg %p127
        $region50: #{_criterion_forward.5} parent=31 // pred_check_branch
          %375 = sbr.rel (%p373) target = $region52
        $region51: #{_criterion_forward.5} parent=31 // pred_region
          %376 = dma.done [#allocation3], 16
        $region52: #{_criterion_forward.5} parent=31 // pred_fallthru
          _
        // Predicated region
        $region53: #{_criterion_forward.5} parent=31 // pred_check
          %p377 = pneg %p148
        $region54: #{_criterion_forward.5} parent=31 // pred_check_branch
          %379 = sbr.rel (%p377) target = $region56
        $region55: #{_criterion_forward.5} parent=31 // pred_region
          %380 = dma.done [#allocation5], 16
        $region56: #{_criterion_forward.5} parent=31 // pred_fallthru
          _
      $region32: #{_criterion_forward.5} parent=5 // pred_fallthru
        _
      %p381 = scmp.le.s32.totalorder 2, %s13
      // Predicated region
      $region57: #{_criterion_forward.5} parent=5 // pred_check
        %p382 = pneg %p381
      $region58: #{_criterion_forward.5} parent=5 // pred_check_branch
        %384 = sbr.rel (%p382) target = $region60
      $region59: #{_criterion_forward.5} parent=5 // pred_region
        %s385 = ssub.s32 %s13, 2
      $region60: #{_criterion_forward.5} parent=5 // pred_fallthru
        _
    $region6: #{_criterion_forward.5} parent=1 // loop_footer
      %s17 = sadd.s32 1, %s13
    $region7: #{_criterion_forward.5} parent=1 // loop_footer_branch
      %12 = sbr.rel target = $region3
    $region8: #{_criterion_forward.5} parent=1 // loop_exit
      _
    %386 = vsyncpa [#allocation3], 1
    %s387 = scalar_lea.sflag [#allocation3], 1
    %388 = vsyncpa %s387, 1
    %389 = vsyncpa [#allocation5], 1

</llo_original>
